<compile_context>
chip_gen: v7x
topology: tpu7x:2x2x1
jax: 0.10.0
libtpu: 0.0.40
codegen_flags: <defaults>
</compile_context>

<pallas_src>
import functools

import jax
import jax.numpy as jnp
from jax.experimental import pallas as pl
from jax.experimental.pallas import tpu as pltpu

_MIB = 1 << 20

# Per-TensorCore VMEM is 128 MiB on v5e/v6e but only 64 MiB on v7x (and info
# queries may report per-chip numbers on multi-TC chips); size everything for the
# 64 MiB-per-TC floor so the same limits are safe on all three generations.
_VMEM_LIMIT_BYTES = 48 * _MIB     # scoped-VMEM limit requested from Mosaic
_BLOCK_VMEM_BUDGET = 32 * _MIB    # modelled footprint of one pipelined block set


def _norm_kernel(x_ref, alpha_ref, bias_ref, o_ref, *, eps, d_model, fold):
    """Row-wise Norm: alpha * (x - mean) / (unbiased_std + eps) + bias.

    With fold > 1 the lane axis holds `fold` independent rows of length d_model
    packed back-to-back (lane-dense layout for d_model < 128); statistics are
    computed per segment, while the final scale/shift and the store run at full
    128-lane width.
    """
    x = x_ref[...].astype(jnp.float32)                 # (tile_rows, fold * d_model)
    alpha = alpha_ref[...].astype(jnp.float32)         # (1, fold * d_model)
    bias = bias_ref[...].astype(jnp.float32)
    inv_d = jnp.float32(1.0 / d_model)
    inv_dm1 = jnp.float32(1.0 / (d_model - 1))         # torch.std is unbiased (N-1)
    eps_f = jnp.float32(eps)

    def _one_segment(xm):
        mean = jnp.sum(xm, axis=-1, keepdims=True) * inv_d
        xc = xm - mean
        var = jnp.sum(xc * xc, axis=-1, keepdims=True) * inv_dm1
        # torch forward divides by (std + eps) — not sqrt(var + eps). EUP reciprocal.
        inv = pl.reciprocal(jnp.sqrt(var) + eps_f, approx=False)
        return xc * inv

    if fold == 1:
        y = _one_segment(x)
    else:
        parts = [
            _one_segment(x[:, m * d_model:(m + 1) * d_model]) for m in range(fold)
        ]
        y = jnp.concatenate(parts, axis=-1)            # back to full lane width
    o_ref[...] = (alpha * y + bias).astype(o_ref.dtype)


def _pick_tile_rows(rows, width, itemsize):
    """Rows per block: sublane-aligned, VMEM-bounded, MiB-scale, >=2 grid steps."""
    sublane = max(8, 32 // max(itemsize, 1))           # f32: 8, bf16: 16, int8: 32
    if rows <= sublane:
        return rows                                    # single block == full array
    # Modelled VMEM per tile row while pipelining: double-buffered input + output
    # blocks in the native dtype plus ~3 f32-wide temporaries in the body.
    per_row_vmem = width * (4 * itemsize + 12)
    vmem_rows = max(sublane, _BLOCK_VMEM_BUDGET // max(per_row_vmem, 1))
    # Aim for >=8 grid steps (pipelining + v7x megacore sharding), but never shrink
    # a block below ~2 MiB of native data just to add steps (the ~0.35us per-step
    # overhead only amortizes with MiB-scale blocks). VMEM is the only hard ceiling.
    row_bytes = width * itemsize
    floor_rows = (2 * _MIB + row_bytes - 1) // row_bytes
    step_rows = (rows + 7) // 8
    tile = min(vmem_rows, max(floor_rows, step_rows))
    tile = max(sublane, (tile // sublane) * sublane)
    if tile >= rows:
        # A single-block grid defeats software pipelining and leaves one v7x
        # TensorCore idle: force a 2-way split when the halves stay sublane-aligned.
        half = (((rows + 1) // 2) + sublane - 1) // sublane * sublane
        if half < rows:
            tile = half
    return tile


def norm_forward(x, alpha, bias, eps=1e-6, tile_rows=None):
    """Applies Norm (torch-style layernorm with unbiased std) over the last axis."""
    orig_shape = x.shape
    d_model = orig_shape[-1]
    assert d_model > 1, "unbiased std needs d_model > 1"

    rows = 1
    for s in orig_shape[:-1]:
        rows *= s
    itemsize = jnp.dtype(x.dtype).itemsize

    # Lane folding: pack fold = 128 // d_model rows into each 128-lane slab so the
    # output store is full-lane (unmasked vst) — the biggest measured TPU lever.
    fold = 1
    if 8 <= d_model < 128 and 128 % d_model == 0:
        k = 128 // d_model
        if rows % k == 0:
            fold = k
    # TODO(synk): d_model >= 128 that is not a multiple of 128 (and tiny /
    # non-divisor d_model) still uses masked partial-lane stores; a general
    # ragged lane-folding is not implemented here.
    width = fold * d_model
    grid_rows = rows // fold

    x2 = x.reshape(grid_rows, width)
    alpha2 = jnp.tile(alpha.reshape(-1), fold).reshape(1, width)
    bias2 = jnp.tile(bias.reshape(-1), fold).reshape(1, width)

    if tile_rows is None:
        tile_rows = _pick_tile_rows(grid_rows, width, itemsize)
    else:
        tile_rows = max(1, min(int(tile_rows), grid_rows))
        if tile_rows < grid_rows:
            sublane = max(8, 32 // max(itemsize, 1))
            tile_rows = max(sublane, (tile_rows // sublane) * sublane)

    # Ragged boundary: no jnp.pad copy (that doubled HBM traffic). Use a cdiv grid
    # with a partial last block — the math is row-local, so garbage rows in the
    # boundary block are harmless and their writes are masked off by Pallas.
    grid = (pl.cdiv(grid_rows, tile_rows),)

    kernel = functools.partial(_norm_kernel, eps=eps, d_model=d_model, fold=fold)
    cost = pl.CostEstimate(
        flops=7 * rows * d_model,
        transcendentals=2 * rows,                      # sqrt + reciprocal per row
        bytes_accessed=2 * rows * d_model * itemsize + 2 * width * 4,
    )

    out = pl.pallas_call(
        kernel,
        out_shape=jax.ShapeDtypeStruct((grid_rows, width), x.dtype),
        grid_spec=pltpu.PrefetchScalarGridSpec(
            num_scalar_prefetch=0,
            grid=grid,
            in_specs=[
                pl.BlockSpec((tile_rows, width), lambda i: (i, 0)),
                pl.BlockSpec((1, width), lambda i: (0, 0)),
                pl.BlockSpec((1, width), lambda i: (0, 0)),
            ],
            out_specs=pl.BlockSpec((tile_rows, width), lambda i: (i, 0)),
        ),
        compiler_params=pltpu.CompilerParams(
            dimension_semantics=("parallel",),
            vmem_limit_bytes=_VMEM_LIMIT_BYTES,
        ),
        cost_estimate=cost,
    )(x2, alpha2, bias2)

    return out.reshape(orig_shape)


if __name__ == "__main__":
    key = jax.random.PRNGKey(0)
    batch, seq, d_model = 2, 8, 32
    x = jax.random.normal(key, (batch, seq, d_model), dtype=jnp.float32)

    # Deterministic parameter init matching nn.Parameter(torch.ones/zeros(d_model)).
    alpha = jnp.ones((d_model,), dtype=jnp.float32)
    bias = jnp.zeros((d_model,), dtype=jnp.float32)

    out = norm_forward(x, alpha, bias, eps=1e-6)
    out = jax.block_until_ready(out)

    # Reference check in plain JAX (same semantics as the torch forward).
    mean = jnp.mean(x, axis=-1, keepdims=True)
    xc = x - mean
    std = jnp.sqrt(jnp.sum(xc * xc, axis=-1, keepdims=True) / (d_model - 1))
    ref = alpha * xc / (std + 1e-6) + bias
    assert jnp.allclose(out, ref, atol=1e-5, rtol=1e-5), "mismatch vs reference"

    print("KERNEL_OK")
</pallas_src>

<mosaic_0001>
module attributes {stable_mosaic.version = 11 : i64} {
  func.func @_norm_kernel(%arg0: i32, %arg1: memref<4x128xf32, #tpu.memory_space<vmem>>, %arg2: memref<1x128xf32, #tpu.memory_space<vmem>>, %arg3: memref<1x128xf32, #tpu.memory_space<vmem>>, %arg4: memref<4x128xf32, #tpu.memory_space<vmem>>) attributes {dimension_semantics = [#tpu.dimension_semantics<parallel>], iteration_bounds = array<i64: 1>, scalar_prefetch = 0 : i64, scratch_operands = 0 : i64, tpu.core_type = #tpu.core_type<tc>, window_params = [{transform_indices = @transform_0, window_bounds = array<i64: 4, 128>}, {pipeline_mode = #tpu.pipeline_mode<synchronous>, transform_indices = @transform_1, window_bounds = array<i64: 1, 128>}, {pipeline_mode = #tpu.pipeline_mode<synchronous>, transform_indices = @transform_2, window_bounds = array<i64: 1, 128>}, {transform_indices = @transform_3, window_bounds = array<i64: 4, 128>}]} {
    %c0 = arith.constant 0 : index
    %c0_0 = arith.constant 0 : index
    %0 = vector.load %arg1[%c0, %c0_0] : memref<4x128xf32, #tpu.memory_space<vmem>>, vector<4x128xf32>
    %c0_1 = arith.constant 0 : index
    %c0_2 = arith.constant 0 : index
    %1 = vector.load %arg2[%c0_1, %c0_2] : memref<1x128xf32, #tpu.memory_space<vmem>>, vector<1x128xf32>
    %c0_3 = arith.constant 0 : index
    %c0_4 = arith.constant 0 : index
    %2 = vector.load %arg3[%c0_3, %c0_4] : memref<1x128xf32, #tpu.memory_space<vmem>>, vector<1x128xf32>
    %3 = vector.extract_strided_slice %0 {offsets = [0, 0], sizes = [4, 32], strides = [1, 1]} : vector<4x128xf32> to vector<4x32xf32>
    %cst = arith.constant dense<0.000000e+00> : vector<4xf32>
    %4 = vector.multi_reduction <add>, %3, %cst [1] : vector<4x32xf32> to vector<4xf32>
    %5 = vector.shape_cast %4 : vector<4xf32> to vector<4x1xf32>
    %cst_5 = arith.constant 3.125000e-02 : f32
    %6 = vector.broadcast %cst_5 : f32 to vector<4x1xf32>
    %7 = arith.mulf %5, %6 : vector<4x1xf32>
    %8 = vector.broadcast %7 : vector<4x1xf32> to vector<4x32xf32>
    %9 = arith.subf %3, %8 : vector<4x32xf32>
    %10 = arith.mulf %9, %9 : vector<4x32xf32>
    %cst_6 = arith.constant dense<0.000000e+00> : vector<4xf32>
    %11 = vector.multi_reduction <add>, %10, %cst_6 [1] : vector<4x32xf32> to vector<4xf32>
    %12 = vector.shape_cast %11 : vector<4xf32> to vector<4x1xf32>
    %cst_7 = arith.constant 0.0322580636 : f32
    %13 = vector.broadcast %cst_7 : f32 to vector<4x1xf32>
    %14 = arith.mulf %12, %13 : vector<4x1xf32>
    %15 = math.sqrt %14 : vector<4x1xf32>
    %cst_8 = arith.constant 9.99999997E-7 : f32
    %16 = vector.broadcast %cst_8 : f32 to vector<4x1xf32>
    %17 = arith.addf %15, %16 : vector<4x1xf32>
    %18 = tpu.reciprocal %17 : vector<4x1xf32> -> vector<4x1xf32>
    %19 = vector.broadcast %18 : vector<4x1xf32> to vector<4x32xf32>
    %20 = arith.mulf %9, %19 : vector<4x32xf32>
    %21 = vector.extract_strided_slice %0 {offsets = [0, 32], sizes = [4, 32], strides = [1, 1]} : vector<4x128xf32> to vector<4x32xf32>
    %cst_9 = arith.constant dense<0.000000e+00> : vector<4xf32>
    %22 = vector.multi_reduction <add>, %21, %cst_9 [1] : vector<4x32xf32> to vector<4xf32>
    %23 = vector.shape_cast %22 : vector<4xf32> to vector<4x1xf32>
    %cst_10 = arith.constant 3.125000e-02 : f32
    %24 = vector.broadcast %cst_10 : f32 to vector<4x1xf32>
    %25 = arith.mulf %23, %24 : vector<4x1xf32>
    %26 = vector.broadcast %25 : vector<4x1xf32> to vector<4x32xf32>
    %27 = arith.subf %21, %26 : vector<4x32xf32>
    %28 = arith.mulf %27, %27 : vector<4x32xf32>
    %cst_11 = arith.constant dense<0.000000e+00> : vector<4xf32>
    %29 = vector.multi_reduction <add>, %28, %cst_11 [1] : vector<4x32xf32> to vector<4xf32>
    %30 = vector.shape_cast %29 : vector<4xf32> to vector<4x1xf32>
    %cst_12 = arith.constant 0.0322580636 : f32
    %31 = vector.broadcast %cst_12 : f32 to vector<4x1xf32>
    %32 = arith.mulf %30, %31 : vector<4x1xf32>
    %33 = math.sqrt %32 : vector<4x1xf32>
    %cst_13 = arith.constant 9.99999997E-7 : f32
    %34 = vector.broadcast %cst_13 : f32 to vector<4x1xf32>
    %35 = arith.addf %33, %34 : vector<4x1xf32>
    %36 = tpu.reciprocal %35 : vector<4x1xf32> -> vector<4x1xf32>
    %37 = vector.broadcast %36 : vector<4x1xf32> to vector<4x32xf32>
    %38 = arith.mulf %27, %37 : vector<4x32xf32>
    %39 = vector.extract_strided_slice %0 {offsets = [0, 64], sizes = [4, 32], strides = [1, 1]} : vector<4x128xf32> to vector<4x32xf32>
    %cst_14 = arith.constant dense<0.000000e+00> : vector<4xf32>
    %40 = vector.multi_reduction <add>, %39, %cst_14 [1] : vector<4x32xf32> to vector<4xf32>
    %41 = vector.shape_cast %40 : vector<4xf32> to vector<4x1xf32>
    %cst_15 = arith.constant 3.125000e-02 : f32
    %42 = vector.broadcast %cst_15 : f32 to vector<4x1xf32>
    %43 = arith.mulf %41, %42 : vector<4x1xf32>
    %44 = vector.broadcast %43 : vector<4x1xf32> to vector<4x32xf32>
    %45 = arith.subf %39, %44 : vector<4x32xf32>
    %46 = arith.mulf %45, %45 : vector<4x32xf32>
    %cst_16 = arith.constant dense<0.000000e+00> : vector<4xf32>
    %47 = vector.multi_reduction <add>, %46, %cst_16 [1] : vector<4x32xf32> to vector<4xf32>
    %48 = vector.shape_cast %47 : vector<4xf32> to vector<4x1xf32>
    %cst_17 = arith.constant 0.0322580636 : f32
    %49 = vector.broadcast %cst_17 : f32 to vector<4x1xf32>
    %50 = arith.mulf %48, %49 : vector<4x1xf32>
    %51 = math.sqrt %50 : vector<4x1xf32>
    %cst_18 = arith.constant 9.99999997E-7 : f32
    %52 = vector.broadcast %cst_18 : f32 to vector<4x1xf32>
    %53 = arith.addf %51, %52 : vector<4x1xf32>
    %54 = tpu.reciprocal %53 : vector<4x1xf32> -> vector<4x1xf32>
    %55 = vector.broadcast %54 : vector<4x1xf32> to vector<4x32xf32>
    %56 = arith.mulf %45, %55 : vector<4x32xf32>
    %57 = vector.extract_strided_slice %0 {offsets = [0, 96], sizes = [4, 32], strides = [1, 1]} : vector<4x128xf32> to vector<4x32xf32>
    %cst_19 = arith.constant dense<0.000000e+00> : vector<4xf32>
    %58 = vector.multi_reduction <add>, %57, %cst_19 [1] : vector<4x32xf32> to vector<4xf32>
    %59 = vector.shape_cast %58 : vector<4xf32> to vector<4x1xf32>
    %cst_20 = arith.constant 3.125000e-02 : f32
    %60 = vector.broadcast %cst_20 : f32 to vector<4x1xf32>
    %61 = arith.mulf %59, %60 : vector<4x1xf32>
    %62 = vector.broadcast %61 : vector<4x1xf32> to vector<4x32xf32>
    %63 = arith.subf %57, %62 : vector<4x32xf32>
    %64 = arith.mulf %63, %63 : vector<4x32xf32>
    %cst_21 = arith.constant dense<0.000000e+00> : vector<4xf32>
    %65 = vector.multi_reduction <add>, %64, %cst_21 [1] : vector<4x32xf32> to vector<4xf32>
    %66 = vector.shape_cast %65 : vector<4xf32> to vector<4x1xf32>
    %cst_22 = arith.constant 0.0322580636 : f32
    %67 = vector.broadcast %cst_22 : f32 to vector<4x1xf32>
    %68 = arith.mulf %66, %67 : vector<4x1xf32>
    %69 = math.sqrt %68 : vector<4x1xf32>
    %cst_23 = arith.constant 9.99999997E-7 : f32
    %70 = vector.broadcast %cst_23 : f32 to vector<4x1xf32>
    %71 = arith.addf %69, %70 : vector<4x1xf32>
    %72 = tpu.reciprocal %71 : vector<4x1xf32> -> vector<4x1xf32>
    %73 = vector.broadcast %72 : vector<4x1xf32> to vector<4x32xf32>
    %74 = arith.mulf %63, %73 : vector<4x32xf32>
    %75 = tpu.concatenate %20, %38, %56, %74 in 1 : vector<4x32xf32>, vector<4x32xf32>, vector<4x32xf32>, vector<4x32xf32> -> vector<4x128xf32>
    %76 = vector.broadcast %1 : vector<1x128xf32> to vector<4x128xf32>
    %77 = arith.mulf %76, %75 : vector<4x128xf32>
    %78 = vector.broadcast %2 : vector<1x128xf32> to vector<4x128xf32>
    %79 = arith.addf %77, %78 : vector<4x128xf32>
    %c0_24 = arith.constant 0 : index
    %c0_25 = arith.constant 0 : index
    %80 = vector.load %arg4[%c0_24, %c0_25] : memref<4x128xf32, #tpu.memory_space<vmem>>, vector<4x128xf32>
    tpu.vector_store %arg4[%c0_24, %c0_25], %79 {strides = array<i32>} : memref<4x128xf32, #tpu.memory_space<vmem>>, vector<4x128xf32>,
    return
  }
  func.func @transform_0(%arg0: i32) -> (i32, i32) {
    %c0_i32 = arith.constant 0 : i32
    %c0_i32_0 = arith.constant 0 : i32
    return %arg0, %c0_i32 : i32, i32
  }
  func.func @transform_1(%arg0: i32) -> (i32, i32) {
    %c0_i32 = arith.constant 0 : i32
    %c0_i32_0 = arith.constant 0 : i32
    %c0_i32_1 = arith.constant 0 : i32
    return %c0_i32, %c0_i32_0 : i32, i32
  }
  func.func @transform_2(%arg0: i32) -> (i32, i32) {
    %c0_i32 = arith.constant 0 : i32
    %c0_i32_0 = arith.constant 0 : i32
    %c0_i32_1 = arith.constant 0 : i32
    return %c0_i32, %c0_i32_0 : i32, i32
  }
  func.func @transform_3(%arg0: i32) -> (i32, i32) {
    %c0_i32 = arith.constant 0 : i32
    %c0_i32_0 = arith.constant 0 : i32
    return %arg0, %c0_i32 : i32, i32
  }
}

</mosaic_0001>

<llo_original>
// kernel: tpu_custom_call.1
$region0: #{tpu_custom_call.1}
  #allocation0 [shape = 'u32[]', space=smem, size = 0x4, offset = 0x4, fixed_abs, tag = 'smem constant byte address 0x4 - core index']
  #allocation1 [shape = 'u32[144,128]{1,0:T(1,128)}', space=vmem, size = 0x12000, scoped, tag = 'internal scratch']
  %s0 = inlined_call_operand.hbm [shape: f32[4,128], index: 0, kind: input, shape index: {}]
  %s1 = inlined_call_operand.vmem [shape: f32[1,128], index: 1, kind: input, shape index: {}]
  %s2 = inlined_call_operand.vmem [shape: f32[1,128], index: 2, kind: input, shape index: {}]
  %s3 = inlined_call_operand.hbm [shape: f32[4,128], index: 3, kind: output, shape index: {}]
  %s4 = sld [smem:[#allocation0]]
  $region26: #{tpu_custom_call.1} parent=0
    _
  %s6 = ssub.s32 1, %s4
  %s7 = scalar_select 0, %s6, %s4
  $region1: #{tpu_custom_call.1} parent=0
    #allocation2 [shape = 'u8[2048]{0}', space=vmem, size = 0x800, scoped, tag = 'input window, operand 0, single buffered']
    #allocation3 [shape = 's32[1]{0}', space=sflag, size = 0x4, scoped, tag = 'scoped memory for tpu_custom_call.1']
    #allocation4 [shape = 's32[1]{0}', space=sflag, size = 0x4, scoped, tag = 'scoped memory for tpu_custom_call.1']
    #allocation5 [shape = 'u8[2048]{0}', space=vmem, size = 0x800, scoped, tag = 'output window, operand 0, single buffered']
    %8 = vsyncpa [#allocation3], 0
    %9 = vsyncpa [#allocation4], 0
    // Predicated region
    $region2: #{tpu_custom_call.1} parent=1 // pred_check
      _
    $region3: #{tpu_custom_call.1} parent=1 // pred_check_branch
      %11 = sbr.rel (0) target = $region5
    $region4: #{tpu_custom_call.1} parent=1 // pred_region
      %s13 = ssub.s32 64, 64
      %14 = vsyncadd [#allocation3], %s13
      %s16 = sshll.u32 [#allocation2], 4
      %s17 = int_to_ptr.vmem [resolvable:$true] %s16
      %19 = dma.hbm_to_vmem [thread:$0]  %s0, 64, %s17, [#allocation3]
    $region5: #{tpu_custom_call.1} parent=1 // pred_fallthru
      _
    // Predicated region
    $region6: #{tpu_custom_call.1} parent=1 // pred_check
      _
    $region7: #{tpu_custom_call.1} parent=1 // pred_check_branch
      %21 = sbr.rel (0) target = $region9
    $region8: #{tpu_custom_call.1} parent=1 // pred_region
      _
    $region9: #{tpu_custom_call.1} parent=1 // pred_fallthru
      _
    // Predicated region
    $region10: #{tpu_custom_call.1} parent=1 // pred_check
      _
    $region11: #{tpu_custom_call.1} parent=1 // pred_check_branch
      %23 = sbr.rel (0) target = $region13
    $region12: #{tpu_custom_call.1} parent=1 // pred_region
      _
    $region13: #{tpu_custom_call.1} parent=1 // pred_fallthru
      _
    // Predicated region
    $region14: #{tpu_custom_call.1} parent=1 // pred_check
      _
    $region15: #{tpu_custom_call.1} parent=1 // pred_check_branch
      %25 = sbr.rel (0) target = $region17
    $region16: #{tpu_custom_call.1} parent=1 // pred_region
      %26 = dma.done [#allocation3], 64
    $region17: #{tpu_custom_call.1} parent=1 // pred_fallthru
      _
    %v27 = vld [vmem:[#allocation2] sm:$0xf]
    %v28 = vld [vmem:[%s1] sm:$0x1]
    %v29 = vld [vmem:[%s2] sm:$0x1]
    %vm30 = vcmask 257024
    %v31 = vsel %vm30, %v27, 0.0
    %32 = vadd.xlane.f32.xlu0 %v31
    %v33 = vpop.xlane.xlu0 %32
    %v34 = vmul.f32 %v33, 0.03125
    %v35 = vsub.f32 %v27, %v34
    %v36 = vmul.f32 %v35, %v35
    %v37 = vsel %vm30, %v36, 0.0
    %38 = vadd.xlane.f32.xlu0 %v37
    %v39 = vpop.xlane.xlu0 %38
    %v40 = vmul.f32 %v39, 0.032258064
    %v41 = vrsqrt.pop %v40
    %v42 = vmul.f32 %v40, %v41
    %vm43 = vcmp.eq.f32.partialorder %v40, inf
    %v44 = vsel %vm43, %v40, %v42
    %vm45 = vcmp.eq.f32.partialorder %v40, 0.0
    %v46 = vand.u32 %v40, 2147483648
    %v47 = vsel %vm45, %v46, %v44
    %v48 = vadd.f32 %v47, 1e-06
    %v49 = vrcp.pop %v48
    %v50 = vmul.f32 %v35, %v49
    %52 = vrot.lane.b32.xlu0 %v27, 96
    %v53 = vpop.permute.xlu0 %52
    %v55 = vsel %vm30, %v53, 0.0
    %56 = vadd.xlane.f32.xlu0 %v55
    %v57 = vpop.xlane.xlu0 %56
    %v58 = vmul.f32 %v57, 0.03125
    %v59 = vsub.f32 %v27, %v58
    %v60 = vmul.f32 %v59, %v59
    %62 = vrot.lane.b32.xlu0 %v60, 96
    %v63 = vpop.permute.xlu0 %62
    %v65 = vsel %vm30, %v63, 0.0
    %66 = vadd.xlane.f32.xlu0 %v65
    %v67 = vpop.xlane.xlu0 %66
    %v68 = vmul.f32 %v67, 0.032258064
    %v69 = vrsqrt.pop %v68
    %v70 = vmul.f32 %v68, %v69
    %vm71 = vcmp.eq.f32.partialorder %v68, inf
    %v72 = vsel %vm71, %v68, %v70
    %vm73 = vcmp.eq.f32.partialorder %v68, 0.0
    %v74 = vand.u32 %v68, 2147483648
    %v75 = vsel %vm73, %v74, %v72
    %v76 = vadd.f32 %v75, 1e-06
    %v77 = vrcp.pop %v76
    %v78 = vmul.f32 %v59, %v77
    %79 = vrot.lane.b32.xlu0 %v27, 64
    %v80 = vpop.permute.xlu0 %79
    %v82 = vsel %vm30, %v80, 0.0
    %83 = vadd.xlane.f32.xlu0 %v82
    %v84 = vpop.xlane.xlu0 %83
    %v85 = vmul.f32 %v84, 0.03125
    %v86 = vsub.f32 %v27, %v85
    %v87 = vmul.f32 %v86, %v86
    %89 = vrot.lane.b32.xlu0 %v87, 64
    %v90 = vpop.permute.xlu0 %89
    %v92 = vsel %vm30, %v90, 0.0
    %93 = vadd.xlane.f32.xlu0 %v92
    %v94 = vpop.xlane.xlu0 %93
    %v95 = vmul.f32 %v94, 0.032258064
    %v96 = vrsqrt.pop %v95
    %v97 = vmul.f32 %v95, %v96
    %vm98 = vcmp.eq.f32.partialorder %v95, inf
    %v99 = vsel %vm98, %v95, %v97
    %vm100 = vcmp.eq.f32.partialorder %v95, 0.0
    %v101 = vand.u32 %v95, 2147483648
    %v102 = vsel %vm100, %v101, %v99
    %v103 = vadd.f32 %v102, 1e-06
    %v104 = vrcp.pop %v103
    %v105 = vmul.f32 %v86, %v104
    %106 = vrot.lane.b32.xlu0 %v27, 32
    %v107 = vpop.permute.xlu0 %106
    %v109 = vsel %vm30, %v107, 0.0
    %110 = vadd.xlane.f32.xlu0 %v109
    %v111 = vpop.xlane.xlu0 %110
    %v112 = vmul.f32 %v111, 0.03125
    %v113 = vsub.f32 %v27, %v112
    %v114 = vmul.f32 %v113, %v113
    %116 = vrot.lane.b32.xlu0 %v114, 32
    %v117 = vpop.permute.xlu0 %116
    %v119 = vsel %vm30, %v117, 0.0
    %120 = vadd.xlane.f32.xlu0 %v119
    %v121 = vpop.xlane.xlu0 %120
    %v122 = vmul.f32 %v121, 0.032258064
    %v123 = vrsqrt.pop %v122
    %v124 = vmul.f32 %v122, %v123
    %vm125 = vcmp.eq.f32.partialorder %v122, inf
    %v126 = vsel %vm125, %v122, %v124
    %vm127 = vcmp.eq.f32.partialorder %v122, 0.0
    %v128 = vand.u32 %v122, 2147483648
    %v129 = vsel %vm127, %v128, %v126
    %v130 = vadd.f32 %v129, 1e-06
    %v131 = vrcp.pop %v130
    %v132 = vmul.f32 %v113, %v131
    %vm133 = vcmask 261120
    %v134 = vsel %vm133, %v50, %v78
    %vm135 = vcmask 523264
    %v136 = vsel %vm135, %v134, %v105
    %vm137 = vcmask 785408
    %v138 = vsel %vm137, %v136, %v132
    %v140 = vlaneseq
    %v141 = vshrl.u32 %v140, 7
    %v142 = vsub.s32 0, %v141
    %v143 = vrot.slane %v28, %v142
    %v145 = vmul.f32 %v143, %v138
    %v147 = vlaneseq
    %v148 = vshrl.u32 %v147, 7
    %v149 = vsub.s32 0, %v148
    %v150 = vrot.slane %v29, %v149
    %v152 = vadd.f32 %v145, %v150
    %153 = vst [vmem:[#allocation5] sm:$0xf] %v152
    // Predicated region
    $region18: #{tpu_custom_call.1} parent=1 // pred_check
      _
    $region19: #{tpu_custom_call.1} parent=1 // pred_check_branch
      %155 = sbr.rel (0) target = $region21
    $region20: #{tpu_custom_call.1} parent=1 // pred_region
      %s157 = ssub.s32 64, 64
      %158 = vsyncadd [#allocation4], %s157
      %s160 = sshll.u32 [#allocation5], 4
      %s161 = int_to_ptr.vmem [resolvable:$true] %s160
      %163 = dma.vmem_to_hbm [thread:$0]  %s161, 64, %s3, [#allocation4]
    $region21: #{tpu_custom_call.1} parent=1 // pred_fallthru
      _
    // Predicated region
    $region22: #{tpu_custom_call.1} parent=1 // pred_check
      _
    $region23: #{tpu_custom_call.1} parent=1 // pred_check_branch
      %165 = sbr.rel (0) target = $region25
    $region24: #{tpu_custom_call.1} parent=1 // pred_region
      %166 = dma.done [#allocation4], 64
    $region25: #{tpu_custom_call.1} parent=1 // pred_fallthru
      _
    %167 = vsyncpa [#allocation3], 1
    %168 = vsyncpa [#allocation4], 1

</llo_original>
